<compile_context>
chip_gen: v7x
topology: tpu7x:2x2x1
jax: 0.10.0
libtpu: 0.0.40
codegen_flags: <defaults>
</compile_context>

<pallas_src>
import jax
import jax.numpy as jnp
from jax.experimental import pallas as pl
from jax.experimental.pallas import tpu as pltpu

IN_FEAT = (256 + 256) * 3   # 1536, classify_head in_channels
NUM_CLASSES = 4             # classify_head out_channels


def _classify_head_kernel(feat_ref, w_ref, b_ref, out_ref):
    """out[b, o] = sum_k feat[b, k] * w[o, k] + bias[o] — single step, whole problem in VMEM."""
    # MXU contraction over K: (B, K) x (OUT, K) -> (B, OUT), f32 accumulate.
    acc = jax.lax.dot_general(
        feat_ref[...], w_ref[...],
        dimension_numbers=(((1,), (1,)), ((), ())),
        preferred_element_type=jnp.float32,
    )
    out_ref[...] = (acc + b_ref[...]).astype(out_ref.dtype)


def classify_head_pallas(feat_2d, weight_ok, bias_row):
    """feat_2d: (B, K), weight_ok: (OUT, K), bias_row: (1, OUT) f32 -> (B, OUT) f32."""
    B, K = feat_2d.shape
    OUT, K2 = weight_ok.shape
    assert K == K2, "feature dim mismatch between feat and classify_head weight"

    feat_bytes = B * K * jnp.dtype(feat_2d.dtype).itemsize
    w_bytes = OUT * K * jnp.dtype(weight_ok.dtype).itemsize
    io_bytes = feat_bytes + w_bytes + OUT * 4 + B * OUT * 4

    return pl.pallas_call(
        _classify_head_kernel,
        out_shape=jax.ShapeDtypeStruct((B, OUT), jnp.float32),
        in_specs=[
            pl.BlockSpec(memory_space=pltpu.MemorySpace.VMEM),   # feat (B, K)
            pl.BlockSpec(memory_space=pltpu.MemorySpace.VMEM),   # weight (OUT, K)
            pl.BlockSpec(memory_space=pltpu.MemorySpace.VMEM),   # bias (1, OUT)
        ],
        out_specs=pl.BlockSpec(memory_space=pltpu.MemorySpace.VMEM),
        cost_estimate=pl.CostEstimate(
            flops=2 * B * OUT * K,
            bytes_accessed=io_bytes,
            transcendentals=0,
        ),
        compiler_params=pltpu.CompilerParams(
            # Let XLA fuse the upstream flatten/producer of feat into the kernel
            # input instead of materializing feat_2d to HBM; weight/bias are params.
            allow_input_fusion=[True, False, False],
        ),
    )(feat_2d, weight_ok, bias_row)


def universal_classify_forward(feat, weight, bias):
    """JAX/Pallas equivalent of Universal_classify_modelV2.forward with use_feat=True.

    feat   : (B, 1536, 1, 1, 1) or (B, 1536)  -- feature tensor (native dtype kept)
    weight : (4, 1536, 1, 1, 1)               -- classify_head Conv3d weight
    bias   : (4,)                             -- classify_head Conv3d bias
    returns: (B, 4, 1, 1, 1)                  -- classify_logits (f32)
    """
    B = feat.shape[0]
    feat_2d = feat.reshape(B, -1)                          # .flatten(1); no dtype cast here
    w_ok = weight.reshape(NUM_CLASSES, IN_FEAT)            # lane-dense (OUT, K), no transpose
    b_row = bias.reshape(1, NUM_CLASSES).astype(jnp.float32)
    logits_2d = classify_head_pallas(feat_2d, w_ok, b_row)  # (B, OUT)
    return logits_2d.reshape(B, NUM_CLASSES, 1, 1, 1)


def init_params(key):
    """Deterministic init matching Conv3d(1536, 4, kernel_size=1) parameter shapes
    (PyTorch default: uniform in +/- 1/sqrt(fan_in))."""
    kw, kb = jax.random.split(key)
    bound = 1.0 / jnp.sqrt(jnp.float32(IN_FEAT))
    weight = jax.random.uniform(
        kw, (NUM_CLASSES, IN_FEAT, 1, 1, 1), jnp.float32, -bound, bound
    )
    bias = jax.random.uniform(kb, (NUM_CLASSES,), jnp.float32, -bound, bound)
    return weight, bias


if __name__ == "__main__":
    key = jax.random.PRNGKey(0)
    k_feat, k_params = jax.random.split(key)

    B = 2
    # feat as produced upstream: (B, 1536, 1, 1, 1); flatten(1) gives (B, 1536).
    feat = jax.random.normal(k_feat, (B, IN_FEAT, 1, 1, 1), dtype=jnp.float32)
    weight, bias = init_params(k_params)

    logits = universal_classify_forward(feat, weight, bias)
    logits = jax.block_until_ready(logits)

    # Pure-JAX reference (1x1x1 conv == dense layer).
    ref = (
        feat.reshape(B, -1).astype(jnp.float32)
        @ weight.reshape(NUM_CLASSES, IN_FEAT).T.astype(jnp.float32)
        + bias
    ).reshape(B, NUM_CLASSES, 1, 1, 1)

    assert logits.shape == (B, NUM_CLASSES, 1, 1, 1)
    assert jnp.allclose(logits, ref, atol=1e-4, rtol=1e-4)

    print("KERNEL_OK")
</pallas_src>

<mosaic_0001>
module attributes {stable_mosaic.version = 11 : i64} {
  func.func @_classify_head_kernel(%arg0: memref<2x1536xf32, #tpu.memory_space<vmem>>, %arg1: memref<4x1536xf32, #tpu.memory_space<vmem>>, %arg2: memref<1x4xf32, #tpu.memory_space<vmem>>, %arg3: memref<2x4xf32, #tpu.memory_space<vmem>>) attributes {dimension_semantics = [], scalar_prefetch = 0 : i64, scratch_operands = 0 : i64, tpu.core_type = #tpu.core_type<tc>} {
    %c0 = arith.constant 0 : index
    %c0_0 = arith.constant 0 : index
    %0 = vector.load %arg0[%c0, %c0_0] : memref<2x1536xf32, #tpu.memory_space<vmem>>, vector<2x1536xf32>
    %c0_1 = arith.constant 0 : index
    %c0_2 = arith.constant 0 : index
    %1 = vector.load %arg1[%c0_1, %c0_2] : memref<4x1536xf32, #tpu.memory_space<vmem>>, vector<4x1536xf32>
    %cst = arith.constant dense<0.000000e+00> : vector<2x4xf32>
    %2 = tpu.matmul %0, %1, %cst {dimension_numbers = #tpu.dot_dimension_numbers<[1], [1], [0], [0], [0, 0, 1, 0], [], []>} : vector<2x1536xf32>, vector<4x1536xf32>, vector<2x4xf32> -> vector<2x4xf32>
    %c0_3 = arith.constant 0 : index
    %c0_4 = arith.constant 0 : index
    %3 = vector.load %arg2[%c0_3, %c0_4] : memref<1x4xf32, #tpu.memory_space<vmem>>, vector<1x4xf32>
    %4 = vector.broadcast %3 : vector<1x4xf32> to vector<2x4xf32>
    %5 = arith.addf %2, %4 : vector<2x4xf32>
    %c0_5 = arith.constant 0 : index
    %c0_6 = arith.constant 0 : index
    %6 = vector.load %arg3[%c0_5, %c0_6] : memref<2x4xf32, #tpu.memory_space<vmem>>, vector<2x4xf32>
    tpu.vector_store %arg3[%c0_5, %c0_6], %5 {strides = array<i32>} : memref<2x4xf32, #tpu.memory_space<vmem>>, vector<2x4xf32>,
    return
  }
}

</mosaic_0001>

<llo_original>
// kernel: tpu_custom_call.1
$region0: #{tpu_custom_call.1}
  #allocation0 [shape = 'u32[]', space=smem, size = 0x4, offset = 0x4, fixed_abs, tag = 'smem constant byte address 0x4 - core index']
  #allocation1 [shape = 'u32[144,128]{1,0:T(1,128)}', space=vmem, size = 0x12000, scoped, tag = 'internal scratch']
  %s0 = inlined_call_operand.hbm [shape: f32[2,1536], index: 0, kind: input, shape index: {}]
  %s1 = inlined_call_operand.hbm [shape: f32[4,1536], index: 1, kind: input, shape index: {}]
  %s2 = inlined_call_operand.vmem [shape: f32[1,4], index: 2, kind: input, shape index: {}]
  %s3 = inlined_call_operand.hbm [shape: f32[2,4], index: 3, kind: output, shape index: {}]
  %s4 = sld [smem:[#allocation0]]
  $region30: #{tpu_custom_call.1} parent=0
    _
  %s6 = ssub.s32 1, %s4
  %s7 = scalar_select 0, %s6, %s4
  $region1: #{tpu_custom_call.1} parent=0
    #allocation2 [shape = 'u8[12288]{0}', space=vmem, size = 0x3000, scoped, tag = 'input window, operand 0, single buffered']
    #allocation3 [shape = 's32[1]{0}', space=sflag, size = 0x4, scoped, tag = 'scoped memory for tpu_custom_call.1']
    #allocation4 [shape = 's32[1]{0}', space=sflag, size = 0x4, scoped, tag = 'scoped memory for tpu_custom_call.1']
    #allocation5 [shape = 'u8[24576]{0}', space=vmem, size = 0x6000, scoped, tag = 'input window, operand 1, single buffered']
    #allocation6 [shape = 's32[1]{0}', space=sflag, size = 0x4, scoped, tag = 'scoped memory for tpu_custom_call.1']
    #allocation7 [shape = 'u8[1024]{0}', space=vmem, size = 0x400, scoped, tag = 'output window, operand 0, single buffered']
    %8 = vsyncpa [#allocation3], 0
    %9 = vsyncpa [#allocation6], 0
    %10 = vsyncpa [#allocation4], 0
    // Predicated region
    $region2: #{tpu_custom_call.1} parent=1 // pred_check
      _
    $region3: #{tpu_custom_call.1} parent=1 // pred_check_branch
      %12 = sbr.rel (0) target = $region5
    $region4: #{tpu_custom_call.1} parent=1 // pred_region
      %s14 = ssub.s32 384, 384
      %15 = vsyncadd [#allocation3], %s14
      %s17 = sshll.u32 [#allocation2], 4
      %s18 = int_to_ptr.vmem [resolvable:$true] %s17
      %20 = dma.hbm_to_vmem [thread:$0]  %s0, 384, %s18, [#allocation3]
    $region5: #{tpu_custom_call.1} parent=1 // pred_fallthru
      _
    // Predicated region
    $region6: #{tpu_custom_call.1} parent=1 // pred_check
      _
    $region7: #{tpu_custom_call.1} parent=1 // pred_check_branch
      %22 = sbr.rel (0) target = $region9
    $region8: #{tpu_custom_call.1} parent=1 // pred_region
      %s24 = ssub.s32 768, 768
      %25 = vsyncadd [#allocation6], %s24
      %s27 = sshll.u32 [#allocation5], 4
      %s28 = int_to_ptr.vmem [resolvable:$true] %s27
      %30 = dma.hbm_to_vmem [thread:$0]  %s1, 768, %s28, [#allocation6]
    $region9: #{tpu_custom_call.1} parent=1 // pred_fallthru
      _
    // Predicated region
    $region10: #{tpu_custom_call.1} parent=1 // pred_check
      _
    $region11: #{tpu_custom_call.1} parent=1 // pred_check_branch
      %32 = sbr.rel (0) target = $region13
    $region12: #{tpu_custom_call.1} parent=1 // pred_region
      _
    $region13: #{tpu_custom_call.1} parent=1 // pred_fallthru
      _
    // Predicated region
    $region14: #{tpu_custom_call.1} parent=1 // pred_check
      _
    $region15: #{tpu_custom_call.1} parent=1 // pred_check_branch
      %34 = sbr.rel (0) target = $region17
    $region16: #{tpu_custom_call.1} parent=1 // pred_region
      %35 = dma.done [#allocation3], 384
    $region17: #{tpu_custom_call.1} parent=1 // pred_fallthru
      _
    // Predicated region
    $region18: #{tpu_custom_call.1} parent=1 // pred_check
      _
    $region19: #{tpu_custom_call.1} parent=1 // pred_check_branch
      %37 = sbr.rel (0) target = $region21
    $region20: #{tpu_custom_call.1} parent=1 // pred_region
      %38 = dma.done [#allocation6], 768
    $region21: #{tpu_custom_call.1} parent=1 // pred_fallthru
      _
    %v39 = vld [vmem:[#allocation2] sm:$0xff]
    %v40 = vld [vmem:[#allocation2 + $0x8] sm:$0xff]
    %v41 = vld [vmem:[#allocation2 + $0x10] sm:$0xff]
    %v42 = vld [vmem:[#allocation5] sm:$0xff]
    %v43 = vld [vmem:[#allocation5 + $0x8] sm:$0xff]
    %v44 = vld [vmem:[#allocation5 + $0x10] sm:$0xff]
    %v45 = vld [vmem:[#allocation5 + $0x18] sm:$0xff]
    %v46 = vld [vmem:[#allocation5 + $0x20] sm:$0xff]
    %v47 = vld [vmem:[#allocation5 + $0x28] sm:$0xff]
    %v48 = vld [vmem:[%s2] sm:$0x1]
    %v50 = vlaneseq
    %v51 = vshrl.u32 %v50, 7
    %v52 = vsub.s32 0, %v51
    %v53 = vrot.slane %v48, %v52
    %v58 = vcombine.high %v39, %v39
    %v60 = vunpack.c.l.s4 1983009808
    %v61 = vunpack.c.0.s8 %v60
    %v62 = vlaneseq
    %v63 = vshrl.u32 %v62, 7
    %v64 = vsub.s32 %v61, %v63
    %v65 = vrot.slane %v39, %v64
    %v67 = vunpack.c.l.s4 1983009808
    %v68 = vunpack.c.0.s8 %v67
    %v69 = vlaneseq
    %v70 = vshrl.u32 %v69, 7
    %v71 = vsub.s32 %v68, %v70
    %v72 = vrot.slane %v58, %v71
    %v73 = vcombine.high %v65, %v65
    %v74 = vcombine.high %v72, %v72
    %v75 = vcombine.high %v40, %v40
    %v77 = vunpack.c.l.s4 1983009808
    %v78 = vunpack.c.0.s8 %v77
    %v79 = vlaneseq
    %v80 = vshrl.u32 %v79, 7
    %v81 = vsub.s32 %v78, %v80
    %v82 = vrot.slane %v40, %v81
    %v84 = vunpack.c.l.s4 1983009808
    %v85 = vunpack.c.0.s8 %v84
    %v86 = vlaneseq
    %v87 = vshrl.u32 %v86, 7
    %v88 = vsub.s32 %v85, %v87
    %v89 = vrot.slane %v75, %v88
    %v90 = vcombine.high %v82, %v82
    %v91 = vcombine.high %v89, %v89
    %v92 = vcombine.high %v41, %v41
    %v94 = vunpack.c.l.s4 1983009808
    %v95 = vunpack.c.0.s8 %v94
    %v96 = vlaneseq
    %v97 = vshrl.u32 %v96, 7
    %v98 = vsub.s32 %v95, %v97
    %v99 = vrot.slane %v41, %v98
    %v101 = vunpack.c.l.s4 1983009808
    %v102 = vunpack.c.0.s8 %v101
    %v103 = vlaneseq
    %v104 = vshrl.u32 %v103, 7
    %v105 = vsub.s32 %v102, %v104
    %v106 = vrot.slane %v92, %v105
    %v107 = vcombine.high %v99, %v99
    %v108 = vcombine.high %v106, %v106
    %v127 = vcombine.high %v42, %v42
    %v128 = vcombine.high %v43, %v43
    %v129 = vcombine.high %v44, %v44
    %v130 = vcombine.high %v45, %v45
    %v131 = vcombine.high %v46, %v46
    %v132 = vcombine.high %v47, %v47
    %139 = vmatprep.subr.mxu0 %v127
    %140 = vmatpush1.xpose.msra.mxu0 %v42
    %141 = vmatprep.subr.mxu0 0.0
    %142 = vmatpush1.xpose.msra.mxu0 0.0
    %143 = vmatprep.subr.mxu0 0.0
    %144 = vmatpush1.xpose.msra.mxu0 0.0
    %145 = vmatprep.subr.mxu0 0.0
    %146 = vmatpush1.xpose.msra.mxu0 0.0
    %147 = vmatprep.subr.mxu0 0.0
    %148 = vmatpush1.xpose.msra.mxu0 0.0
    %149 = vmatprep.subr.mxu0 0.0
    %150 = vmatpush1.xpose.msra.mxu0 0.0
    %151 = vmatprep.subr.mxu0 0.0
    %152 = vmatpush1.xpose.msra.mxu0 0.0
    %153 = vmatprep.subr.mxu0 0.0
    %154 = vmatpush1.xpose.msra.mxu0 0.0
    %155 = vmatprep.subr.mxu0 0.0
    %156 = vmatpush1.xpose.msra.mxu0 0.0
    %157 = vmatprep.subr.mxu0 0.0
    %158 = vmatpush1.xpose.msra.mxu0 0.0
    %159 = vmatprep.subr.mxu0 0.0
    %160 = vmatpush1.xpose.msra.mxu0 0.0
    %161 = vmatprep.subr.mxu0 0.0
    %162 = vmatpush1.xpose.msra.mxu0 0.0
    %163 = vmatprep.subr.mxu0 0.0
    %164 = vmatpush1.xpose.msra.mxu0 0.0
    %165 = vmatprep.subr.mxu0 0.0
    %166 = vmatpush1.xpose.msra.mxu0 0.0
    %167 = vmatprep.subr.mxu0 0.0
    %168 = vmatpush1.xpose.msra.mxu0 0.0
    %169 = vmatprep.subr.mxu0 0.0
    %170 = vmatpush1.xpose.msra.mxu0 0.0
    %171 = vmatprep.subr.mxu0 0.0
    %172 = vmatpush1.xpose.msra.mxu0 0.0
    %173 = vmatprep.subr.mxu0 0.0
    %174 = vmatpush1.xpose.msra.mxu0 0.0
    %175 = vmatprep.subr.mxu0 0.0
    %176 = vmatpush1.xpose.msra.mxu0 0.0
    %177 = vmatprep.subr.mxu0 0.0
    %178 = vmatpush1.xpose.msra.mxu0 0.0
    %179 = vmatprep.subr.mxu0 0.0
    %180 = vmatpush1.xpose.msra.mxu0 0.0
    %181 = vmatprep.subr.mxu0 0.0
    %182 = vmatpush1.xpose.msra.mxu0 0.0
    %183 = vmatprep.subr.mxu0 0.0
    %184 = vmatpush1.xpose.msra.mxu0 0.0
    %185 = vmatprep.subr.mxu0 0.0
    %186 = vmatpush1.xpose.msra.mxu0 0.0
    %187 = vmatprep.subr.mxu0 0.0
    %188 = vmatpush1.xpose.msra.mxu0 0.0
    %189 = vmatprep.subr.mxu0 0.0
    %190 = vmatpush1.xpose.msra.mxu0 0.0
    %191 = vmatprep.subr.mxu0 0.0
    %192 = vmatpush1.xpose.msra.mxu0 0.0
    %193 = vmatprep.subr.mxu0 0.0
    %194 = vmatpush1.xpose.msra.mxu0 0.0
    %195 = vmatprep.subr.mxu0 0.0
    %196 = vmatpush1.xpose.msra.mxu0 0.0
    %197 = vmatprep.subr.mxu0 0.0
    %198 = vmatpush1.xpose.msra.mxu0 0.0
    %199 = vmatprep.subr.mxu0 0.0
    %200 = vmatpush1.xpose.msra.mxu0 0.0
    %201 = vmatprep.subr.mxu0 0.0
    %202 = vmatpush1.xpose.msra.mxu0 0.0
    %203 = vmatprep.mubr.f32.mxu0 %v73
    %204 = vmatmul.mubr.f32.gmra.mrb[0].mxu0 %v65
    %v205 = vpop.f32.mrb[0].mxu0
    %v206 = vadd.f32 %v53, %v205
    %v207 = vpop.f32.mrb[0].mxu0
    %208 = vdwg.mxu0
    %209 = vmatprep.subr.mxu0 %v128
    %210 = vmatpush1.xpose.msra.mxu0 %v43
    %211 = vmatprep.subr.mxu0 0.0
    %212 = vmatpush1.xpose.msra.mxu0 0.0
    %213 = vmatprep.subr.mxu0 0.0
    %214 = vmatpush1.xpose.msra.mxu0 0.0
    %215 = vmatprep.subr.mxu0 0.0
    %216 = vmatpush1.xpose.msra.mxu0 0.0
    %217 = vmatprep.subr.mxu0 0.0
    %218 = vmatpush1.xpose.msra.mxu0 0.0
    %219 = vmatprep.subr.mxu0 0.0
    %220 = vmatpush1.xpose.msra.mxu0 0.0
    %221 = vmatprep.subr.mxu0 0.0
    %222 = vmatpush1.xpose.msra.mxu0 0.0
    %223 = vmatprep.subr.mxu0 0.0
    %224 = vmatpush1.xpose.msra.mxu0 0.0
    %225 = vmatprep.subr.mxu0 0.0
    %226 = vmatpush1.xpose.msra.mxu0 0.0
    %227 = vmatprep.subr.mxu0 0.0
    %228 = vmatpush1.xpose.msra.mxu0 0.0
    %229 = vmatprep.subr.mxu0 0.0
    %230 = vmatpush1.xpose.msra.mxu0 0.0
    %231 = vmatprep.subr.mxu0 0.0
    %232 = vmatpush1.xpose.msra.mxu0 0.0
    %233 = vmatprep.subr.mxu0 0.0
    %234 = vmatpush1.xpose.msra.mxu0 0.0
    %235 = vmatprep.subr.mxu0 0.0
    %236 = vmatpush1.xpose.msra.mxu0 0.0
    %237 = vmatprep.subr.mxu0 0.0
    %238 = vmatpush1.xpose.msra.mxu0 0.0
    %239 = vmatprep.subr.mxu0 0.0
    %240 = vmatpush1.xpose.msra.mxu0 0.0
    %241 = vmatprep.subr.mxu0 0.0
    %242 = vmatpush1.xpose.msra.mxu0 0.0
    %243 = vmatprep.subr.mxu0 0.0
    %244 = vmatpush1.xpose.msra.mxu0 0.0
    %245 = vmatprep.subr.mxu0 0.0
    %246 = vmatpush1.xpose.msra.mxu0 0.0
    %247 = vmatprep.subr.mxu0 0.0
    %248 = vmatpush1.xpose.msra.mxu0 0.0
    %249 = vmatprep.subr.mxu0 0.0
    %250 = vmatpush1.xpose.msra.mxu0 0.0
    %251 = vmatprep.subr.mxu0 0.0
    %252 = vmatpush1.xpose.msra.mxu0 0.0
    %253 = vmatprep.subr.mxu0 0.0
    %254 = vmatpush1.xpose.msra.mxu0 0.0
    %255 = vmatprep.subr.mxu0 0.0
    %256 = vmatpush1.xpose.msra.mxu0 0.0
    %257 = vmatprep.subr.mxu0 0.0
    %258 = vmatpush1.xpose.msra.mxu0 0.0
    %259 = vmatprep.subr.mxu0 0.0
    %260 = vmatpush1.xpose.msra.mxu0 0.0
    %261 = vmatprep.subr.mxu0 0.0
    %262 = vmatpush1.xpose.msra.mxu0 0.0
    %263 = vmatprep.subr.mxu0 0.0
    %264 = vmatpush1.xpose.msra.mxu0 0.0
    %265 = vmatprep.subr.mxu0 0.0
    %266 = vmatpush1.xpose.msra.mxu0 0.0
    %267 = vmatprep.subr.mxu0 0.0
    %268 = vmatpush1.xpose.msra.mxu0 0.0
    %269 = vmatprep.subr.mxu0 0.0
    %270 = vmatpush1.xpose.msra.mxu0 0.0
    %271 = vmatprep.subr.mxu0 0.0
    %272 = vmatpush1.xpose.msra.mxu0 0.0
    %273 = vmatprep.mubr.f32.mxu0 %v74
    %274 = vmatmul.mubr.f32.gmra.mrb[0].mxu0 %v72
    %v275 = vpop.f32.mrb[0].mxu0
    %v276 = vadd.f32 %v206, %v275
    %v277 = vpop.f32.mrb[0].mxu0
    %278 = vdwg.mxu0
    %279 = vmatprep.subr.mxu0 %v129
    %280 = vmatpush1.xpose.msra.mxu0 %v44
    %281 = vmatprep.subr.mxu0 0.0
    %282 = vmatpush1.xpose.msra.mxu0 0.0
    %283 = vmatprep.subr.mxu0 0.0
    %284 = vmatpush1.xpose.msra.mxu0 0.0
    %285 = vmatprep.subr.mxu0 0.0
    %286 = vmatpush1.xpose.msra.mxu0 0.0
    %287 = vmatprep.subr.mxu0 0.0
    %288 = vmatpush1.xpose.msra.mxu0 0.0
    %289 = vmatprep.subr.mxu0 0.0
    %290 = vmatpush1.xpose.msra.mxu0 0.0
    %291 = vmatprep.subr.mxu0 0.0
    %292 = vmatpush1.xpose.msra.mxu0 0.0
    %293 = vmatprep.subr.mxu0 0.0
    %294 = vmatpush1.xpose.msra.mxu0 0.0
    %295 = vmatprep.subr.mxu0 0.0
    %296 = vmatpush1.xpose.msra.mxu0 0.0
    %297 = vmatprep.subr.mxu0 0.0
    %298 = vmatpush1.xpose.msra.mxu0 0.0
    %299 = vmatprep.subr.mxu0 0.0
    %300 = vmatpush1.xpose.msra.mxu0 0.0
    %301 = vmatprep.subr.mxu0 0.0
    %302 = vmatpush1.xpose.msra.mxu0 0.0
    %303 = vmatprep.subr.mxu0 0.0
    %304 = vmatpush1.xpose.msra.mxu0 0.0
    %305 = vmatprep.subr.mxu0 0.0
    %306 = vmatpush1.xpose.msra.mxu0 0.0
    %307 = vmatprep.subr.mxu0 0.0
    %308 = vmatpush1.xpose.msra.mxu0 0.0
    %309 = vmatprep.subr.mxu0 0.0
    %310 = vmatpush1.xpose.msra.mxu0 0.0
    %311 = vmatprep.subr.mxu0 0.0
    %312 = vmatpush1.xpose.msra.mxu0 0.0
    %313 = vmatprep.subr.mxu0 0.0
    %314 = vmatpush1.xpose.msra.mxu0 0.0
    %315 = vmatprep.subr.mxu0 0.0
    %316 = vmatpush1.xpose.msra.mxu0 0.0
    %317 = vmatprep.subr.mxu0 0.0
    %318 = vmatpush1.xpose.msra.mxu0 0.0
    %319 = vmatprep.subr.mxu0 0.0
    %320 = vmatpush1.xpose.msra.mxu0 0.0
    %321 = vmatprep.subr.mxu0 0.0
    %322 = vmatpush1.xpose.msra.mxu0 0.0
    %323 = vmatprep.subr.mxu0 0.0
    %324 = vmatpush1.xpose.msra.mxu0 0.0
    %325 = vmatprep.subr.mxu0 0.0
    %326 = vmatpush1.xpose.msra.mxu0 0.0
    %327 = vmatprep.subr.mxu0 0.0
    %328 = vmatpush1.xpose.msra.mxu0 0.0
    %329 = vmatprep.subr.mxu0 0.0
    %330 = vmatpush1.xpose.msra.mxu0 0.0
    %331 = vmatprep.subr.mxu0 0.0
    %332 = vmatpush1.xpose.msra.mxu0 0.0
    %333 = vmatprep.subr.mxu0 0.0
    %334 = vmatpush1.xpose.msra.mxu0 0.0
    %335 = vmatprep.subr.mxu0 0.0
    %336 = vmatpush1.xpose.msra.mxu0 0.0
    %337 = vmatprep.subr.mxu0 0.0
    %338 = vmatpush1.xpose.msra.mxu0 0.0
    %339 = vmatprep.subr.mxu0 0.0
    %340 = vmatpush1.xpose.msra.mxu0 0.0
    %341 = vmatprep.subr.mxu0 0.0
    %342 = vmatpush1.xpose.msra.mxu0 0.0
    %343 = vmatprep.mubr.f32.mxu0 %v90
    %344 = vmatmul.mubr.f32.gmra.mrb[0].mxu0 %v82
    %v345 = vpop.f32.mrb[0].mxu0
    %v346 = vadd.f32 %v276, %v345
    %v347 = vpop.f32.mrb[0].mxu0
    %348 = vdwg.mxu0
    %349 = vmatprep.subr.mxu0 %v130
    %350 = vmatpush1.xpose.msra.mxu0 %v45
    %351 = vmatprep.subr.mxu0 0.0
    %352 = vmatpush1.xpose.msra.mxu0 0.0
    %353 = vmatprep.subr.mxu0 0.0
    %354 = vmatpush1.xpose.msra.mxu0 0.0
    %355 = vmatprep.subr.mxu0 0.0
    %356 = vmatpush1.xpose.msra.mxu0 0.0
    %357 = vmatprep.subr.mxu0 0.0
    %358 = vmatpush1.xpose.msra.mxu0 0.0
    %359 = vmatprep.subr.mxu0 0.0
    %360 = vmatpush1.xpose.msra.mxu0 0.0
    %361 = vmatprep.subr.mxu0 0.0
    %362 = vmatpush1.xpose.msra.mxu0 0.0
    %363 = vmatprep.subr.mxu0 0.0
    %364 = vmatpush1.xpose.msra.mxu0 0.0
    %365 = vmatprep.subr.mxu0 0.0
    %366 = vmatpush1.xpose.msra.mxu0 0.0
    %367 = vmatprep.subr.mxu0 0.0
    %368 = vmatpush1.xpose.msra.mxu0 0.0
    %369 = vmatprep.subr.mxu0 0.0
    %370 = vmatpush1.xpose.msra.mxu0 0.0
    %371 = vmatprep.subr.mxu0 0.0
    %372 = vmatpush1.xpose.msra.mxu0 0.0
    %373 = vmatprep.subr.mxu0 0.0
    %374 = vmatpush1.xpose.msra.mxu0 0.0
    %375 = vmatprep.subr.mxu0 0.0
    %376 = vmatpush1.xpose.msra.mxu0 0.0
    %377 = vmatprep.subr.mxu0 0.0
    %378 = vmatpush1.xpose.msra.mxu0 0.0
    %379 = vmatprep.subr.mxu0 0.0
    %380 = vmatpush1.xpose.msra.mxu0 0.0
    %381 = vmatprep.subr.mxu0 0.0
    %382 = vmatpush1.xpose.msra.mxu0 0.0
    %383 = vmatprep.subr.mxu0 0.0
    %384 = vmatpush1.xpose.msra.mxu0 0.0
    %385 = vmatprep.subr.mxu0 0.0
    %386 = vmatpush1.xpose.msra.mxu0 0.0
    %387 = vmatprep.subr.mxu0 0.0
    %388 = vmatpush1.xpose.msra.mxu0 0.0
    %389 = vmatprep.subr.mxu0 0.0
    %390 = vmatpush1.xpose.msra.mxu0 0.0
    %391 = vmatprep.subr.mxu0 0.0
    %392 = vmatpush1.xpose.msra.mxu0 0.0
    %393 = vmatprep.subr.mxu0 0.0
    %394 = vmatpush1.xpose.msra.mxu0 0.0
    %395 = vmatprep.subr.mxu0 0.0
    %396 = vmatpush1.xpose.msra.mxu0 0.0
    %397 = vmatprep.subr.mxu0 0.0
    %398 = vmatpush1.xpose.msra.mxu0 0.0
    %399 = vmatprep.subr.mxu0 0.0
    %400 = vmatpush1.xpose.msra.mxu0 0.0
    %401 = vmatprep.subr.mxu0 0.0
    %402 = vmatpush1.xpose.msra.mxu0 0.0
    %403 = vmatprep.subr.mxu0 0.0
    %404 = vmatpush1.xpose.msra.mxu0 0.0
    %405 = vmatprep.subr.mxu0 0.0
    %406 = vmatpush1.xpose.msra.mxu0 0.0
    %407 = vmatprep.subr.mxu0 0.0
    %408 = vmatpush1.xpose.msra.mxu0 0.0
    %409 = vmatprep.subr.mxu0 0.0
    %410 = vmatpush1.xpose.msra.mxu0 0.0
    %411 = vmatprep.subr.mxu0 0.0
    %412 = vmatpush1.xpose.msra.mxu0 0.0
    %413 = vmatprep.mubr.f32.mxu0 %v91
    %414 = vmatmul.mubr.f32.gmra.mrb[0].mxu0 %v89
    %v415 = vpop.f32.mrb[0].mxu0
    %v416 = vadd.f32 %v346, %v415
    %v417 = vpop.f32.mrb[0].mxu0
    %418 = vdwg.mxu0
    %419 = vmatprep.subr.mxu0 %v131
    %420 = vmatpush1.xpose.msra.mxu0 %v46
    %421 = vmatprep.subr.mxu0 0.0
    %422 = vmatpush1.xpose.msra.mxu0 0.0
    %423 = vmatprep.subr.mxu0 0.0
    %424 = vmatpush1.xpose.msra.mxu0 0.0
    %425 = vmatprep.subr.mxu0 0.0
    %426 = vmatpush1.xpose.msra.mxu0 0.0
    %427 = vmatprep.subr.mxu0 0.0
    %428 = vmatpush1.xpose.msra.mxu0 0.0
    %429 = vmatprep.subr.mxu0 0.0
    %430 = vmatpush1.xpose.msra.mxu0 0.0
    %431 = vmatprep.subr.mxu0 0.0
    %432 = vmatpush1.xpose.msra.mxu0 0.0
    %433 = vmatprep.subr.mxu0 0.0
    %434 = vmatpush1.xpose.msra.mxu0 0.0
    %435 = vmatprep.subr.mxu0 0.0
    %436 = vmatpush1.xpose.msra.mxu0 0.0
    %437 = vmatprep.subr.mxu0 0.0
    %438 = vmatpush1.xpose.msra.mxu0 0.0
    %439 = vmatprep.subr.mxu0 0.0
    %440 = vmatpush1.xpose.msra.mxu0 0.0
    %441 = vmatprep.subr.mxu0 0.0
    %442 = vmatpush1.xpose.msra.mxu0 0.0
    %443 = vmatprep.subr.mxu0 0.0
    %444 = vmatpush1.xpose.msra.mxu0 0.0
    %445 = vmatprep.subr.mxu0 0.0
    %446 = vmatpush1.xpose.msra.mxu0 0.0
    %447 = vmatprep.subr.mxu0 0.0
    %448 = vmatpush1.xpose.msra.mxu0 0.0
    %449 = vmatprep.subr.mxu0 0.0
    %450 = vmatpush1.xpose.msra.mxu0 0.0
    %451 = vmatprep.subr.mxu0 0.0
    %452 = vmatpush1.xpose.msra.mxu0 0.0
    %453 = vmatprep.subr.mxu0 0.0
    %454 = vmatpush1.xpose.msra.mxu0 0.0
    %455 = vmatprep.subr.mxu0 0.0
    %456 = vmatpush1.xpose.msra.mxu0 0.0
    %457 = vmatprep.subr.mxu0 0.0
    %458 = vmatpush1.xpose.msra.mxu0 0.0
    %459 = vmatprep.subr.mxu0 0.0
    %460 = vmatpush1.xpose.msra.mxu0 0.0
    %461 = vmatprep.subr.mxu0 0.0
    %462 = vmatpush1.xpose.msra.mxu0 0.0
    %463 = vmatprep.subr.mxu0 0.0
    %464 = vmatpush1.xpose.msra.mxu0 0.0
    %465 = vmatprep.subr.mxu0 0.0
    %466 = vmatpush1.xpose.msra.mxu0 0.0
    %467 = vmatprep.subr.mxu0 0.0
    %468 = vmatpush1.xpose.msra.mxu0 0.0
    %469 = vmatprep.subr.mxu0 0.0
    %470 = vmatpush1.xpose.msra.mxu0 0.0
    %471 = vmatprep.subr.mxu0 0.0
    %472 = vmatpush1.xpose.msra.mxu0 0.0
    %473 = vmatprep.subr.mxu0 0.0
    %474 = vmatpush1.xpose.msra.mxu0 0.0
    %475 = vmatprep.subr.mxu0 0.0
    %476 = vmatpush1.xpose.msra.mxu0 0.0
    %477 = vmatprep.subr.mxu0 0.0
    %478 = vmatpush1.xpose.msra.mxu0 0.0
    %479 = vmatprep.subr.mxu0 0.0
    %480 = vmatpush1.xpose.msra.mxu0 0.0
    %481 = vmatprep.subr.mxu0 0.0
    %482 = vmatpush1.xpose.msra.mxu0 0.0
    %483 = vmatprep.mubr.f32.mxu0 %v107
    %484 = vmatmul.mubr.f32.gmra.mrb[0].mxu0 %v99
    %v485 = vpop.f32.mrb[0].mxu0
    %v486 = vadd.f32 %v416, %v485
    %v487 = vpop.f32.mrb[0].mxu0
    %488 = vdwg.mxu0
    %489 = vmatprep.subr.mxu0 %v132
    %490 = vmatpush1.xpose.msra.mxu0 %v47
    %491 = vmatprep.subr.mxu0 0.0
    %492 = vmatpush1.xpose.msra.mxu0 0.0
    %493 = vmatprep.subr.mxu0 0.0
    %494 = vmatpush1.xpose.msra.mxu0 0.0
    %495 = vmatprep.subr.mxu0 0.0
    %496 = vmatpush1.xpose.msra.mxu0 0.0
    %497 = vmatprep.subr.mxu0 0.0
    %498 = vmatpush1.xpose.msra.mxu0 0.0
    %499 = vmatprep.subr.mxu0 0.0
    %500 = vmatpush1.xpose.msra.mxu0 0.0
    %501 = vmatprep.subr.mxu0 0.0
    %502 = vmatpush1.xpose.msra.mxu0 0.0
    %503 = vmatprep.subr.mxu0 0.0
    %504 = vmatpush1.xpose.msra.mxu0 0.0
    %505 = vmatprep.subr.mxu0 0.0
    %506 = vmatpush1.xpose.msra.mxu0 0.0
    %507 = vmatprep.subr.mxu0 0.0
    %508 = vmatpush1.xpose.msra.mxu0 0.0
    %509 = vmatprep.subr.mxu0 0.0
    %510 = vmatpush1.xpose.msra.mxu0 0.0
    %511 = vmatprep.subr.mxu0 0.0
    %512 = vmatpush1.xpose.msra.mxu0 0.0
    %513 = vmatprep.subr.mxu0 0.0
    %514 = vmatpush1.xpose.msra.mxu0 0.0
    %515 = vmatprep.subr.mxu0 0.0
    %516 = vmatpush1.xpose.msra.mxu0 0.0
    %517 = vmatprep.subr.mxu0 0.0
    %518 = vmatpush1.xpose.msra.mxu0 0.0
    %519 = vmatprep.subr.mxu0 0.0
    %520 = vmatpush1.xpose.msra.mxu0 0.0
    %521 = vmatprep.subr.mxu0 0.0
    %522 = vmatpush1.xpose.msra.mxu0 0.0
    %523 = vmatprep.subr.mxu0 0.0
    %524 = vmatpush1.xpose.msra.mxu0 0.0
    %525 = vmatprep.subr.mxu0 0.0
    %526 = vmatpush1.xpose.msra.mxu0 0.0
    %527 = vmatprep.subr.mxu0 0.0
    %528 = vmatpush1.xpose.msra.mxu0 0.0
    %529 = vmatprep.subr.mxu0 0.0
    %530 = vmatpush1.xpose.msra.mxu0 0.0
    %531 = vmatprep.subr.mxu0 0.0
    %532 = vmatpush1.xpose.msra.mxu0 0.0
    %533 = vmatprep.subr.mxu0 0.0
    %534 = vmatpush1.xpose.msra.mxu0 0.0
    %535 = vmatprep.subr.mxu0 0.0
    %536 = vmatpush1.xpose.msra.mxu0 0.0
    %537 = vmatprep.subr.mxu0 0.0
    %538 = vmatpush1.xpose.msra.mxu0 0.0
    %539 = vmatprep.subr.mxu0 0.0
    %540 = vmatpush1.xpose.msra.mxu0 0.0
    %541 = vmatprep.subr.mxu0 0.0
    %542 = vmatpush1.xpose.msra.mxu0 0.0
    %543 = vmatprep.subr.mxu0 0.0
    %544 = vmatpush1.xpose.msra.mxu0 0.0
    %545 = vmatprep.subr.mxu0 0.0
    %546 = vmatpush1.xpose.msra.mxu0 0.0
    %547 = vmatprep.subr.mxu0 0.0
    %548 = vmatpush1.xpose.msra.mxu0 0.0
    %549 = vmatprep.subr.mxu0 0.0
    %550 = vmatpush1.xpose.msra.mxu0 0.0
    %551 = vmatprep.subr.mxu0 0.0
    %552 = vmatpush1.xpose.msra.mxu0 0.0
    %553 = vmatprep.mubr.f32.mxu0 %v108
    %554 = vmatmul.mubr.f32.gmra.mrb[0].mxu0 %v106
    %v555 = vpop.f32.mrb[0].mxu0
    %v556 = vadd.f32 %v486, %v555
    %v557 = vpop.f32.mrb[0].mxu0
    %558 = vdwg.mxu0
    %vm559 = vcmask 25600
    %560 = vst.msk [vmem:[#allocation7] sm:$0x3] %vm559, %v556
    // Predicated region
    $region22: #{tpu_custom_call.1} parent=1 // pred_check
      _
    $region23: #{tpu_custom_call.1} parent=1 // pred_check_branch
      %562 = sbr.rel (0) target = $region25
    $region24: #{tpu_custom_call.1} parent=1 // pred_region
      %s564 = ssub.s32 32, 32
      %565 = vsyncadd [#allocation4], %s564
      %s567 = sshll.u32 [#allocation7], 4
      %s568 = int_to_ptr.vmem [resolvable:$true] %s567
      %570 = dma.vmem_to_hbm [thread:$0]  %s568, 32, %s3, [#allocation4]
    $region25: #{tpu_custom_call.1} parent=1 // pred_fallthru
      _
    // Predicated region
    $region26: #{tpu_custom_call.1} parent=1 // pred_check
      _
    $region27: #{tpu_custom_call.1} parent=1 // pred_check_branch
      %572 = sbr.rel (0) target = $region29
    $region28: #{tpu_custom_call.1} parent=1 // pred_region
      %573 = dma.done [#allocation4], 32
    $region29: #{tpu_custom_call.1} parent=1 // pred_fallthru
      _
    %574 = vsyncpa [#allocation3], 1
    %575 = vsyncpa [#allocation6], 1
    %576 = vsyncpa [#allocation4], 1

</llo_original>
